<compile_context>
chip_gen: v7x
topology: tpu7x:2x2x1
jax: 0.10.0
libtpu: 0.0.40
codegen_flags: <defaults>
</compile_context>

<pallas_src>
import jax
import jax.numpy as jnp
from jax.experimental import pallas as pl
from jax.experimental.pallas import tpu as pltpu

SPEC_MAG_EPS = 1e-14  # speechbrain spectral_magnitude eps (used when power < 1)
_MCOLS = 128          # lane width of the moment matrix; cols 0..2 = [1, f, f^2]


def _cdiv(a, b):
    return -(-a // b)


def _moment_epilogue(m, out_ref):
    """m: (tT, 128) raw moments (cols 0..2 = m0, m1, m2). Writes spread."""
    m0 = m[:, 0:1]
    m1 = m[:, 1:2]
    m2 = m[:, 2:3]
    r0 = pl.reciprocal(m0, approx=False)          # reused for centroid + spread
    u1 = m1 * r0                                  # spectral centroid (Hz)
    var = jnp.maximum(m2 * r0 - u1 * u1, 0.0)     # guard cancellation
    out_ref[0] = jnp.sqrt(var).astype(out_ref.dtype)


def _power_kernel(x_ref, w_ref, out_ref):
    # x_ref block: (1, tT, 2F), re/im interleaved along lanes.
    # w_ref: (2F, 128) resident; both lanes of a bin carry that bin's
    # [1, f, f^2] weights, so the power branch needs NO de-interleave at all.
    x = x_ref[0].astype(jnp.float32)
    m = jnp.dot(x * x, w_ref[...], preferred_element_type=jnp.float32,
                precision=jax.lax.Precision.HIGHEST)
    _moment_epilogue(m, out_ref)


def _magnitude_kernel(x_ref, sel_ref, w_ref, out_ref):
    # sel_ref: (2F, F) resident 0/1 de-interleave matrix; w_ref: (F, 128).
    x = x_ref[0].astype(jnp.float32)
    power = jnp.dot(x * x, sel_ref[...], preferred_element_type=jnp.float32,
                    precision=jax.lax.Precision.HIGH)          # re^2 + im^2
    spectr = jnp.sqrt(power + SPEC_MAG_EPS)                    # (tT, F)
    m = jnp.dot(spectr, w_ref[...], preferred_element_type=jnp.float32,
                precision=jax.lax.Precision.HIGHEST)
    _moment_epilogue(m, out_ref)


def _pick_time_tile(n_time, two_f, n_batch, bytes_per_elem,
                    target_bytes=8 * 1024 * 1024, min_grid_steps=8):
    """Rows per input tile: ~target_bytes, a multiple of 8 (sublane quantum),
    capped so the (B, n_t) grid keeps enough steps for double-buffering and
    for both v7x TensorCores under ('parallel','parallel') semantics."""
    rows = max(8, (target_bytes // max(two_f * bytes_per_elem, 1)) // 8 * 8)
    if n_batch * _cdiv(n_time, rows) < min_grid_steps and n_time > 8:
        want_t_steps = max(1, _cdiv(min_grid_steps, n_batch))
        rows = min(rows, max(8, _cdiv(_cdiv(n_time, want_t_steps), 8) * 8))
    return n_time if rows >= n_time else rows


def spectral_spread(x, sample_rate=16000, spectrum_type="power", time_tile=None):
    """x: (B, T, F, 2) frequency-domain signal (real/imag last). Returns (B, T, 1)."""
    assert x.ndim == 4 and x.shape[-1] == 2, (
        "only the frequency-domain branch (B, T, F, 2) is implemented"
    )
    B, T, F, _ = x.shape
    n_fft = (F - 1) * 2
    two_f = 2 * F
    df = float(sample_rate) / float(n_fft)  # Hz per rfft bin: freqs[k] = k * df

    # Zero-copy: fold the trailing re/im dim into the lane axis (contiguous
    # reshape, no HBM round-trip).  Input dtype (f32 / bf16) is passed through;
    # the kernel upcasts in VMEM.
    xi = x.reshape(B, T, two_f)

    if time_tile is None:
        time_tile = _pick_time_tile(T, two_f, B, jnp.dtype(x.dtype).itemsize)
    tT = min(time_tile, T)
    n_t = _cdiv(T, tT)

    # Resident constants — loaded into VMEM once (constant block index (0,0)),
    # never rebuilt from iotas inside the kernel.
    freqs = jnp.arange(F, dtype=jnp.float32) * df
    w = jnp.zeros((F, _MCOLS), jnp.float32)
    w = w.at[:, 0].set(1.0).at[:, 1].set(freqs).at[:, 2].set(freqs * freqs)

    x_spec = pl.BlockSpec((1, tT, two_f), lambda b, t: (b, t, 0))
    out_spec = pl.BlockSpec((1, tT, 1), lambda b, t: (b, t, 0))

    def const_spec(shape):
        return pl.BlockSpec(shape, lambda b, t: (0, 0))

    if spectrum_type == "magnitude":
        sel = (jnp.arange(two_f)[:, None] // 2
               == jnp.arange(F)[None, :]).astype(jnp.float32)     # (2F, F)
        kernel = _magnitude_kernel
        operands = (xi, sel, w)
        in_specs = [x_spec, const_spec((two_f, F)), const_spec((F, _MCOLS))]
    else:
        w2 = jnp.repeat(w, 2, axis=0)                             # (2F, 128)
        kernel = _power_kernel
        operands = (xi, w2)
        in_specs = [x_spec, const_spec((two_f, _MCOLS))]

    out = pl.pallas_call(
        kernel,
        out_shape=jax.ShapeDtypeStruct((B, T, 1), jnp.float32),
        grid_spec=pltpu.PrefetchScalarGridSpec(
            num_scalar_prefetch=0,
            grid=(B, n_t),
            in_specs=in_specs,
            out_specs=out_spec,
        ),
        compiler_params=pltpu.CompilerParams(
            dimension_semantics=("parallel", "parallel"),
            # 2 x ~8 MiB double-buffered input tiles + resident W/sel fit with
            # headroom inside v7x's 64 MiB; raises v5e/v6e's 16/32 MiB default.
            vmem_limit_bytes=48 * 1024 * 1024,
        ),
    )(*operands)
    return out


def spectral_spread_ref(x, sample_rate=16000, spectrum_type="power"):
    """Pure-JAX reference mirroring the PyTorch forward (frequency-domain branch)."""
    power = jnp.sum(x.astype(jnp.float32) ** 2, axis=-1)        # (B, T, F)
    if spectrum_type == "magnitude":
        spectr = jnp.sqrt(power + SPEC_MAG_EPS)
    else:
        spectr = power
    F = x.shape[2]
    n_fft = (F - 1) * 2
    freqs = jnp.arange(F, dtype=jnp.float32) * (sample_rate / n_fft)
    s0 = spectr.sum(-1, keepdims=True)
    u1 = (spectr * freqs).sum(-1, keepdims=True) / s0           # centroid
    d2 = (freqs[None, None, :] - u1) ** 2
    return jnp.sqrt((spectr * d2).sum(-1, keepdims=True) / s0)  # spread


if __name__ == "__main__":
    # Small shapes: batch=2, time_step=8, n_fft=32 -> F = n_fft/2 + 1 = 17
    B, T, NFFT, SR = 2, 8, 32, 16000
    F = NFFT // 2 + 1

    key = jax.random.PRNGKey(0)
    x = jax.random.normal(key, (B, T, F, 2), dtype=jnp.float32)

    # Power-spectrum branch (module default), single time tile.
    out = jax.block_until_ready(spectral_spread(x, SR, "power"))
    ref = spectral_spread_ref(x, SR, "power")
    assert out.shape == (B, T, 1), out.shape
    assert jnp.allclose(out, ref, atol=1e-2, rtol=1e-4), (
        f"power: max abs err {jnp.max(jnp.abs(out - ref))}"
    )

    # Magnitude-spectrum branch.
    out_m = jax.block_until_ready(spectral_spread(x, SR, "magnitude"))
    ref_m = spectral_spread_ref(x, SR, "magnitude")
    assert jnp.allclose(out_m, ref_m, atol=1e-2, rtol=1e-3), (
        f"magnitude: max abs err {jnp.max(jnp.abs(out_m - ref_m))}"
    )

    # Tiled-time path: grid over both batch and time tiles.
    T2 = 16
    x2 = jax.random.normal(jax.random.PRNGKey(1), (B, T2, F, 2), dtype=jnp.float32)
    out2 = jax.block_until_ready(spectral_spread(x2, SR, "power", time_tile=8))
    ref2 = spectral_spread_ref(x2, SR, "power")
    assert out2.shape == (B, T2, 1), out2.shape
    assert jnp.allclose(out2, ref2, atol=1e-2, rtol=1e-4), (
        f"tiled: max abs err {jnp.max(jnp.abs(out2 - ref2))}"
    )

    # bf16 input path (kernel is HBM-read bound; bf16 spectra halve traffic).
    x_bf = x.astype(jnp.bfloat16)
    out_bf = jax.block_until_ready(spectral_spread(x_bf, SR, "power"))
    ref_bf = spectral_spread_ref(x_bf.astype(jnp.float32), SR, "power")
    assert jnp.allclose(out_bf, ref_bf, atol=1e-1, rtol=1e-3), (
        f"bf16: max abs err {jnp.max(jnp.abs(out_bf - ref_bf))}"
    )

    print("KERNEL_OK")
</pallas_src>

<mosaic_0001>
module attributes {stable_mosaic.version = 11 : i64} {
  func.func @_power_kernel(%arg0: i32, %arg1: i32, %arg2: memref<1x8x34xf32, #tpu.memory_space<vmem>>, %arg3: memref<34x128xf32, #tpu.memory_space<vmem>>, %arg4: memref<1x8x1xf32, #tpu.memory_space<vmem>>) attributes {dimension_semantics = [#tpu.dimension_semantics<parallel>, #tpu.dimension_semantics<parallel>], iteration_bounds = array<i64: 2, 1>, scalar_prefetch = 0 : i64, scratch_operands = 0 : i64, tpu.core_type = #tpu.core_type<tc>, window_params = [{transform_indices = @transform_0, window_bounds = array<i64: 1, 8, 34>}, {pipeline_mode = #tpu.pipeline_mode<synchronous>, transform_indices = @transform_1, window_bounds = array<i64: 34, 128>}, {transform_indices = @transform_2, window_bounds = array<i64: 1, 8, 1>}]} {
    %c0 = arith.constant 0 : index
    %c0_0 = arith.constant 0 : index
    %c0_1 = arith.constant 0 : index
    %0 = vector.load %arg2[%c0, %c0_0, %c0_1] : memref<1x8x34xf32, #tpu.memory_space<vmem>>, vector<1x8x34xf32>
    %1 = vector.shape_cast %0 : vector<1x8x34xf32> to vector<8x34xf32>
    %2 = arith.mulf %1, %1 : vector<8x34xf32>
    %c0_2 = arith.constant 0 : index
    %c0_3 = arith.constant 0 : index
    %3 = vector.load %arg3[%c0_2, %c0_3] : memref<34x128xf32, #tpu.memory_space<vmem>>, vector<34x128xf32>
    %cst = arith.constant dense<0.000000e+00> : vector<8x128xf32>
    %4 = tpu.matmul %2, %3, %cst {dimension_numbers = #tpu.dot_dimension_numbers<[1], [0], [0], [1], [0, 0, 1, 1], [], []>, precision = #tpu.contract_precision<fp32>} : vector<8x34xf32>, vector<34x128xf32>, vector<8x128xf32> -> vector<8x128xf32>
    %5 = vector.extract_strided_slice %4 {offsets = [0, 0], sizes = [8, 1], strides = [1, 1]} : vector<8x128xf32> to vector<8x1xf32>
    %6 = vector.extract_strided_slice %4 {offsets = [0, 1], sizes = [8, 1], strides = [1, 1]} : vector<8x128xf32> to vector<8x1xf32>
    %7 = vector.extract_strided_slice %4 {offsets = [0, 2], sizes = [8, 1], strides = [1, 1]} : vector<8x128xf32> to vector<8x1xf32>
    %8 = tpu.reciprocal %5 : vector<8x1xf32> -> vector<8x1xf32>
    %9 = arith.mulf %6, %8 : vector<8x1xf32>
    %10 = arith.mulf %7, %8 : vector<8x1xf32>
    %11 = arith.mulf %9, %9 : vector<8x1xf32>
    %12 = arith.subf %10, %11 : vector<8x1xf32>
    %cst_4 = arith.constant 0.000000e+00 : f32
    %13 = vector.broadcast %cst_4 : f32 to vector<8x1xf32>
    %14 = arith.maximumf %12, %13 : vector<8x1xf32>
    %15 = math.sqrt %14 : vector<8x1xf32>
    %c0_5 = arith.constant 0 : index
    %c0_6 = arith.constant 0 : index
    %c0_7 = arith.constant 0 : index
    %16 = vector.load %arg4[%c0_5, %c0_6, %c0_7] : memref<1x8x1xf32, #tpu.memory_space<vmem>>, vector<1x8x1xf32>
    %17 = vector.shape_cast %16 : vector<1x8x1xf32> to vector<8x1xf32>
    %18 = vector.shape_cast %15 : vector<8x1xf32> to vector<1x8x1xf32>
    tpu.vector_store %arg4[%c0_5, %c0_6, %c0_7], %18 {strides = array<i32>} : memref<1x8x1xf32, #tpu.memory_space<vmem>>, vector<1x8x1xf32>,
    return
  }
  func.func @transform_0(%arg0: i32, %arg1: i32) -> (i32, i32, i32) {
    %c0_i32 = arith.constant 0 : i32
    %c0_i32_0 = arith.constant 0 : i32
    return %arg0, %arg1, %c0_i32 : i32, i32, i32
  }
  func.func @transform_1(%arg0: i32, %arg1: i32) -> (i32, i32) {
    %c0_i32 = arith.constant 0 : i32
    %c0_i32_0 = arith.constant 0 : i32
    %c0_i32_1 = arith.constant 0 : i32
    return %c0_i32, %c0_i32_0 : i32, i32
  }
  func.func @transform_2(%arg0: i32, %arg1: i32) -> (i32, i32, i32) {
    %c0_i32 = arith.constant 0 : i32
    %c0_i32_0 = arith.constant 0 : i32
    return %arg0, %arg1, %c0_i32 : i32, i32, i32
  }
}

</mosaic_0001>

<llo_original>
// kernel: tpu_custom_call.1
$region0: #{tpu_custom_call.1}
  #allocation0 [shape = 'u32[]', space=smem, size = 0x4, offset = 0x4, fixed_abs, tag = 'smem constant byte address 0x4 - core index']
  #allocation1 [shape = 'u32[144,128]{1,0:T(1,128)}', space=vmem, size = 0x12000, scoped, tag = 'internal scratch']
  %s0 = inlined_call_operand.hbm [shape: f32[2,8,34], index: 0, kind: input, shape index: {}]
  %s1 = inlined_call_operand.hbm [shape: f32[34,128], index: 1, kind: input, shape index: {}]
  %s2 = inlined_call_operand.vmem [shape: f32[2,8,1], index: 2, kind: output, shape index: {}]
  %s3 = sld [smem:[#allocation0]]
  $region49: #{tpu_custom_call.1} parent=0
    _
  %s5 = ssub.s32 1, %s3
  %s6 = scalar_select 0, %s5, %s3
  $region1: #{tpu_custom_call.1} parent=0
    #allocation2 [shape = 'u8[8192]{0}', space=vmem, size = 0x2000, scoped, tag = 'input window, operand 0']
    #allocation3 [shape = 's32[2]{0}', space=sflag, size = 0x8, scoped, tag = 'scoped memory for tpu_custom_call.1']
    #allocation4 [shape = 'u8[20480]{0}', space=vmem, size = 0x5000, scoped, tag = 'input window, operand 1, single buffered']
    #allocation5 [shape = 's32[1]{0}', space=sflag, size = 0x4, scoped, tag = 'scoped memory for tpu_custom_call.1']
    %7 = vsyncpa [#allocation3], 0
    %s8 = scalar_lea.sflag [#allocation3], 1
    %9 = vsyncpa %s8, 0
    %10 = vsyncpa [#allocation5], 0
    loop: start=0, step=1, limit=4
    $region2: #{tpu_custom_call.1} parent=1 // loop_pre_header
      _
    $region3: #{tpu_custom_call.1} parent=1 // loop_header
      %s12 = sphi 0, %s16
      %p13 = scmp.ge.s32.totalorder %s12, 4
      %s19 = sphi 0, %s31
      %s20 = sphi 0, %s27
      %s21 = sphi 0, %s19
      %s22 = sphi 0, %s20
      %s23 = sphi 0, %s21
      %s24 = sphi 0, %s22
      %s36 = sphi 0, %s38
      %s39 = sphi 0, %s36
      %s40 = sphi 0, %s39
      %s56 = sphi 0, %s40
      %s60 = sphi 0, %s60
      %s62 = sphi 0, %s60
      %s63 = sphi 0, %s62
      %s77 = sphi 0, %s63
      %s85 = sphi 0, %s87
      %s88 = sphi 0, %s85
      %s89 = sphi 0, %s88
      %s105 = sphi 0, %s89
    $region4: #{tpu_custom_call.1} parent=1 // loop_header_branch
      %15 = sbr.rel (%p13) target = $region8
    $region5: #{tpu_custom_call.1} parent=1 // loop_body
      %s17 = ssub.s32 %s12, 1
      %s18 = ssub.s32 %s12, 2
      %s25 = sadd.s32 1, %s20
      %p26 = scmp.ge.s32.totalorder %s25, 1
      %s27 = scalar_select %p26, 0, %s25
      %s28 = sadd.s32 1, %s19
      %s29 = scalar_select %p26, %s28, %s19
      %p30 = scmp.ge.s32.totalorder %s29, 2
      %s31 = scalar_select %p30, 0, %s29
      %s32 = ssub.s32 %s19, %s31
      %s33 = ssub.s32 %s20, %s27
      %s34 = sor.u32 %s32, %s33
      %p35 = scmp.eq.s32.totalorder %s34, 0
      %s37 = sadd.s32 %s36, 1
      %s38 = scalar_select %p35, %s36, %s37
      %p41 = pneg %p35
      %p42 = scmp.eq.s32.totalorder %s12, 1
      %p43 = por %p41, %p42
      %p44 = scmp.ne.s32.totalorder %s36, %s39
      %p45 = scmp.eq.s32.totalorder %s12, 0
      %p46 = por %p44, %p45
      %p47 = scmp.ne.s32.totalorder %s36, %s39
      %p48 = scmp.eq.s32.totalorder %s17, 1
      %p49 = por %p47, %p48
      %p50 = scmp.ne.s32.totalorder %s39, %s40
      %p51 = scmp.eq.s32.totalorder %s17, 0
      %p52 = por %p50, %p51
      %p53 = scmp.ne.s32.totalorder %s39, %s40
      %p54 = scmp.eq.s32.totalorder %s18, 1
      %p55 = por %p53, %p54
      %p57 = scmp.ne.s32.totalorder %s40, %s56
      %p58 = scmp.eq.s32.totalorder %s18, 0
      %p59 = por %p57, %p58
      %s61 = sadd.s32 %s60, 1
      %p64 = scmp.eq.s32.totalorder %s12, 1
      %p65 = scmp.ne.s32.totalorder %s60, %s62
      %p66 = scmp.eq.s32.totalorder %s12, 0
      %p67 = por %p65, %p66
      %p68 = scmp.ne.s32.totalorder %s60, %s62
      %p69 = scmp.eq.s32.totalorder %s17, 1
      %p70 = por %p68, %p69
      %p71 = scmp.ne.s32.totalorder %s62, %s63
      %p72 = scmp.eq.s32.totalorder %s17, 0
      %p73 = por %p71, %p72
      %p74 = scmp.ne.s32.totalorder %s62, %s63
      %p75 = scmp.eq.s32.totalorder %s18, 1
      %p76 = por %p74, %p75
      %p78 = scmp.ne.s32.totalorder %s63, %s77
      %p79 = scmp.eq.s32.totalorder %s18, 0
      %p80 = por %p78, %p79
      %s81 = ssub.s32 %s19, %s31
      %s82 = ssub.s32 %s20, %s27
      %s83 = sor.u32 %s81, %s82
      %p84 = scmp.eq.s32.totalorder %s83, 0
      %s86 = sadd.s32 %s85, 1
      %s87 = scalar_select %p84, %s85, %s86
      %p90 = pneg %p84
      %p91 = scmp.eq.s32.totalorder %s12, 1
      %p92 = por %p90, %p91
      %p93 = scmp.ne.s32.totalorder %s85, %s88
      %p94 = scmp.eq.s32.totalorder %s12, 0
      %p95 = por %p93, %p94
      %p96 = scmp.ne.s32.totalorder %s85, %s88
      %p97 = scmp.eq.s32.totalorder %s17, 1
      %p98 = por %p96, %p97
      %p99 = scmp.ne.s32.totalorder %s88, %s89
      %p100 = scmp.eq.s32.totalorder %s17, 0
      %p101 = por %p99, %p100
      %p102 = scmp.ne.s32.totalorder %s88, %s89
      %p103 = scmp.eq.s32.totalorder %s18, 1
      %p104 = por %p102, %p103
      %p106 = scmp.ne.s32.totalorder %s89, %s105
      %p107 = scmp.eq.s32.totalorder %s18, 0
      %p108 = por %p106, %p107
      %p109 = scmp.le.s32.totalorder 1, %s12
      %p110 = scmp.lt.s32.totalorder %s12, 3
      %p111 = pnand %p109, %p110
      %p112 = pneg %p111
      // Predicated region
      $region9: #{tpu_custom_call.1} parent=5 // pred_check
        _
      $region10: #{tpu_custom_call.1} parent=5 // pred_check_branch
        %114 = sbr.rel (%p111) target = $region12
      $region11: #{tpu_custom_call.1} parent=5 // pred_region
        %s115 = ssub.s32 %s12, 1
        // Predicated region
        $region13: #{tpu_custom_call.1} parent=11 // pred_check
          %p116 = pneg %p73
        $region14: #{tpu_custom_call.1} parent=11 // pred_check_branch
          %118 = sbr.rel (%p116) target = $region16
        $region15: #{tpu_custom_call.1} parent=11 // pred_region
          %s120 = ssub.s32 640, 640
          %121 = vsyncadd [#allocation5], %s120
          %s122 = sshll.u32 [#allocation4], 4
          %s123 = int_to_ptr.vmem [resolvable:$true] %s122
          %128 = dma.hbm_to_vmem [thread:$0]  %s1, 640, %s123, [#allocation5], 128, 128, 8
        $region16: #{tpu_custom_call.1} parent=11 // pred_fallthru
          _
      $region12: #{tpu_custom_call.1} parent=5 // pred_fallthru
        _
      %p129 = scmp.lt.s32.totalorder %s12, 2
      // Predicated region
      $region17: #{tpu_custom_call.1} parent=5 // pred_check
        %p130 = pneg %p129
      $region18: #{tpu_custom_call.1} parent=5 // pred_check_branch
        %132 = sbr.rel (%p130) target = $region20
      $region19: #{tpu_custom_call.1} parent=5 // pred_region
        // Predicated region
        $region21: #{tpu_custom_call.1} parent=19 // pred_check
          %p133 = pneg %p46
        $region22: #{tpu_custom_call.1} parent=19 // pred_check_branch
          %135 = sbr.rel (%p133) target = $region24
        $region23: #{tpu_custom_call.1} parent=19 // pred_region
          %s136 = sand.u32 %s36, 1
          %s137 = scalar_lea.sflag [#allocation3], %s136
          %s138 = sand.u32 %s36, 1
          %s139 = smul.addr %s138, 8
          %s140 = scalar_lea.vmem [#allocation2], %s139
          %s142 = ssub.s32 128, 128
          %143 = vsyncadd %s137, %s142
          %s144 = sadd.s32 %s20, %s19
          %s145 = smul.addr %s144, 128
          %s146 = scalar_lea.hbm %s0, %s145
          %s148 = sshll.u32 %s140, 4
          %s149 = int_to_ptr.vmem [resolvable:$true] %s148
          %151 = dma.hbm_to_vmem [thread:$0]  %s146, 128, %s149, %s137
        $region24: #{tpu_custom_call.1} parent=19 // pred_fallthru
          _
      $region20: #{tpu_custom_call.1} parent=5 // pred_fallthru
        _
      %p152 = scmp.le.s32.totalorder 1, %s12
      %p153 = scmp.lt.s32.totalorder %s12, 3
      %p154 = pnand %p152, %p153
      %p155 = pneg %p154
      // Predicated region
      $region25: #{tpu_custom_call.1} parent=5 // pred_check
        _
      $region26: #{tpu_custom_call.1} parent=5 // pred_check_branch
        %157 = sbr.rel (%p154) target = $region28
      $region27: #{tpu_custom_call.1} parent=5 // pred_region
        %s158 = ssub.s32 %s12, 1
        %s159 = sand.u32 %s39, 1
        %s160 = scalar_lea.sflag [#allocation3], %s159
        %s161 = sand.u32 %s39, 1
        %s162 = smul.addr %s161, 8
        %s163 = scalar_lea.vmem [#allocation2], %s162
        // Predicated region
        $region29: #{tpu_custom_call.1} parent=27 // pred_check
          %p164 = pneg %p52
        $region30: #{tpu_custom_call.1} parent=27 // pred_check_branch
          %166 = sbr.rel (%p164) target = $region32
        $region31: #{tpu_custom_call.1} parent=27 // pred_region
          %167 = dma.done %s160, 128
        $region32: #{tpu_custom_call.1} parent=27 // pred_fallthru
          _
        // Predicated region
        $region33: #{tpu_custom_call.1} parent=27 // pred_check
          %p168 = pneg %p73
        $region34: #{tpu_custom_call.1} parent=27 // pred_check_branch
          %170 = sbr.rel (%p168) target = $region36
        $region35: #{tpu_custom_call.1} parent=27 // pred_region
          %171 = dma.done [#allocation5], 640
        $region36: #{tpu_custom_call.1} parent=27 // pred_fallthru
          _
        %s172 = sand.u32 %s39, 1
        %s173 = scalar_lea.sflag [#allocation3], %s172
        %s174 = sand.u32 %s39, 1
        %s175 = smul.addr %s174, 8
        %s176 = scalar_lea.vmem [#allocation2], %s175
        %p177 = pneg %p52
        %p178 = pneg %p49
        %p179 = pneg %p73
        %p180 = pneg %p70
        %p181 = pneg %p101
        %p182 = pneg %p98
        %p183 = scmp.lt.s32.totalorder %s21, 1
        %s184 = scalar_select %p183, %s21, 1
        %p185 = scmp.lt.s32.totalorder %s22, 0
        %s186 = scalar_select %p185, %s22, 0
        %s187 = sadd.s32 %s186, %s184
        %s188 = smul.addr %s187, 8
        %s189 = scalar_lea.vmem %s2, %s188
        %p190 = scmp.lt.s32.totalorder %s21, 1
        %s191 = scalar_select %p190, %s21, 1
        %p192 = scmp.lt.s32.totalorder %s22, 0
        %s193 = scalar_select %p192, %s22, 0
        %s194 = sadd.s32 %s193, %s191
        %s195 = smul.addr %s194, 8
        %s196 = scalar_lea.vmem %s2, %s195
        %v197 = vld [vmem:[%s163] sm:$0xff]
        %v198 = vmul.f32 %v197, %v197
        %v199 = vld [vmem:[#allocation4] sm:$0xff]
        %v200 = vld [vmem:[#allocation4 + $0x8] sm:$0xff]
        %v201 = vld [vmem:[#allocation4 + $0x10] sm:$0xff]
        %v202 = vld [vmem:[#allocation4 + $0x18] sm:$0xff]
        %v203 = vld [vmem:[#allocation4 + $0x20] sm:$0x3]
        %vm204 = vcmask 277504
        %v206 = vsel %vm204, %v198, 0
        %vm208 = vcmask 1041408
        %v210 = vsel %vm208, %v203, 0
        %212 = vmatprep.subr.mxu0 0.0
        %v213 = vand.u32 %v199, 4294901760
        %214 = vmatpush1.msra.mxu0 %v213
        %215 = vmatprep.subr.mxu0 0.0
        %v216 = vand.u32 %v200, 4294901760
        %217 = vmatpush1.msra.mxu0 %v216
        %218 = vmatprep.subr.mxu0 0.0
        %v219 = vand.u32 %v201, 4294901760
        %220 = vmatpush1.msra.mxu0 %v219
        %221 = vmatprep.subr.mxu0 0.0
        %v222 = vand.u32 %v202, 4294901760
        %223 = vmatpush1.msra.mxu0 %v222
        %224 = vmatprep.subr.mxu0 0.0
        %v225 = vand.u32 %v210, 4294901760
        %226 = vmatpush1.msra.mxu0 %v225
        %227 = vmatprep.subr.mxu0 0.0
        %228 = vmatpush1.msra.mxu0 0.0
        %229 = vmatprep.subr.mxu0 0.0
        %230 = vmatpush1.msra.mxu0 0.0
        %231 = vmatprep.subr.mxu0 0.0
        %232 = vmatpush1.msra.mxu0 0.0
        %233 = vmatprep.subr.mxu0 0.0
        %234 = vmatpush1.msra.mxu0 0.0
        %235 = vmatprep.subr.mxu0 0.0
        %236 = vmatpush1.msra.mxu0 0.0
        %237 = vmatprep.subr.mxu0 0.0
        %238 = vmatpush1.msra.mxu0 0.0
        %239 = vmatprep.subr.mxu0 0.0
        %240 = vmatpush1.msra.mxu0 0.0
        %241 = vmatprep.subr.mxu0 0.0
        %242 = vmatpush1.msra.mxu0 0.0
        %243 = vmatprep.subr.mxu0 0.0
        %244 = vmatpush1.msra.mxu0 0.0
        %245 = vmatprep.subr.mxu0 0.0
        %246 = vmatpush1.msra.mxu0 0.0
        %247 = vmatprep.subr.mxu0 0.0
        %248 = vmatpush1.msra.mxu0 0.0
        %249 = vmatprep.subr.mxu0 0.0
        %250 = vmatpush1.msra.mxu0 0.0
        %251 = vmatprep.subr.mxu0 0.0
        %252 = vmatpush1.msra.mxu0 0.0
        %253 = vmatprep.subr.mxu0 0.0
        %254 = vmatpush1.msra.mxu0 0.0
        %255 = vmatprep.subr.mxu0 0.0
        %256 = vmatpush1.msra.mxu0 0.0
        %257 = vmatprep.subr.mxu0 0.0
        %258 = vmatpush1.msra.mxu0 0.0
        %259 = vmatprep.subr.mxu0 0.0
        %260 = vmatpush1.msra.mxu0 0.0
        %261 = vmatprep.subr.mxu0 0.0
        %262 = vmatpush1.msra.mxu0 0.0
        %263 = vmatprep.subr.mxu0 0.0
        %264 = vmatpush1.msra.mxu0 0.0
        %265 = vmatprep.subr.mxu0 0.0
        %266 = vmatpush1.msra.mxu0 0.0
        %267 = vmatprep.subr.mxu0 0.0
        %268 = vmatpush1.msra.mxu0 0.0
        %269 = vmatprep.subr.mxu0 0.0
        %270 = vmatpush1.msra.mxu0 0.0
        %271 = vmatprep.subr.mxu0 0.0
        %272 = vmatpush1.msra.mxu0 0.0
        %273 = vmatprep.subr.mxu0 0.0
        %274 = vmatpush1.msra.mxu0 0.0
        %275 = vmatprep.subr.mxu0 0.0
        %276 = vmatpush1.msra.mxu0 0.0
        %277 = vmatprep.subr.mxu0 0.0
        %278 = vmatpush1.msra.mxu0 0.0
        %279 = vmatprep.subr.mxu0 0.0
        %280 = vmatpush1.msra.mxu0 0.0
        %281 = vmatprep.mubr.f32.mxu0 0.0
        %v282 = vand.u32 %v206, 4294901760
        %v283 = vsub.f32 %v206, %v282
        %v284 = vand.u32 %v283, 4294901760
        %v285 = vsub.f32 %v283, %v284
        %v286 = vand.u32 %v285, 4294901760
        %287 = vmatmul.mubr.f32.gmra.mrb[0].mxu0 %v286
        %v288 = vpop.f32.mrb[0].mxu0
        %v289 = vadd.f32 0.0, %v288
        %v290 = vpop.f32.mrb[0].mxu0
        %291 = vdwg.mxu0
        %292 = vmatprep.subr.mxu0 0.0
        %v293 = vand.u32 %v199, 4294901760
        %v294 = vsub.f32 %v199, %v293
        %v295 = vand.u32 %v294, 4294901760
        %v296 = vsub.f32 %v294, %v295
        %v297 = vand.u32 %v296, 4294901760
        %298 = vmatpush1.msra.mxu0 %v297
        %299 = vmatprep.subr.mxu0 0.0
        %v300 = vand.u32 %v200, 4294901760
        %v301 = vsub.f32 %v200, %v300
        %v302 = vand.u32 %v301, 4294901760
        %v303 = vsub.f32 %v301, %v302
        %v304 = vand.u32 %v303, 4294901760
        %305 = vmatpush1.msra.mxu0 %v304
        %306 = vmatprep.subr.mxu0 0.0
        %v307 = vand.u32 %v201, 4294901760
        %v308 = vsub.f32 %v201, %v307
        %v309 = vand.u32 %v308, 4294901760
        %v310 = vsub.f32 %v308, %v309
        %v311 = vand.u32 %v310, 4294901760
        %312 = vmatpush1.msra.mxu0 %v311
        %313 = vmatprep.subr.mxu0 0.0
        %v314 = vand.u32 %v202, 4294901760
        %v315 = vsub.f32 %v202, %v314
        %v316 = vand.u32 %v315, 4294901760
        %v317 = vsub.f32 %v315, %v316
        %v318 = vand.u32 %v317, 4294901760
        %319 = vmatpush1.msra.mxu0 %v318
        %320 = vmatprep.subr.mxu0 0.0
        %v321 = vand.u32 %v210, 4294901760
        %v322 = vsub.f32 %v210, %v321
        %v323 = vand.u32 %v322, 4294901760
        %v324 = vsub.f32 %v322, %v323
        %v325 = vand.u32 %v324, 4294901760
        %326 = vmatpush1.msra.mxu0 %v325
        %327 = vmatprep.subr.mxu0 0.0
        %328 = vmatpush1.msra.mxu0 0.0
        %329 = vmatprep.subr.mxu0 0.0
        %330 = vmatpush1.msra.mxu0 0.0
        %331 = vmatprep.subr.mxu0 0.0
        %332 = vmatpush1.msra.mxu0 0.0
        %333 = vmatprep.subr.mxu0 0.0
        %334 = vmatpush1.msra.mxu0 0.0
        %335 = vmatprep.subr.mxu0 0.0
        %336 = vmatpush1.msra.mxu0 0.0
        %337 = vmatprep.subr.mxu0 0.0
        %338 = vmatpush1.msra.mxu0 0.0
        %339 = vmatprep.subr.mxu0 0.0
        %340 = vmatpush1.msra.mxu0 0.0
        %341 = vmatprep.subr.mxu0 0.0
        %342 = vmatpush1.msra.mxu0 0.0
        %343 = vmatprep.subr.mxu0 0.0
        %344 = vmatpush1.msra.mxu0 0.0
        %345 = vmatprep.subr.mxu0 0.0
        %346 = vmatpush1.msra.mxu0 0.0
        %347 = vmatprep.subr.mxu0 0.0
        %348 = vmatpush1.msra.mxu0 0.0
        %349 = vmatprep.subr.mxu0 0.0
        %350 = vmatpush1.msra.mxu0 0.0
        %351 = vmatprep.subr.mxu0 0.0
        %352 = vmatpush1.msra.mxu0 0.0
        %353 = vmatprep.subr.mxu0 0.0
        %354 = vmatpush1.msra.mxu0 0.0
        %355 = vmatprep.subr.mxu0 0.0
        %356 = vmatpush1.msra.mxu0 0.0
        %357 = vmatprep.subr.mxu0 0.0
        %358 = vmatpush1.msra.mxu0 0.0
        %359 = vmatprep.subr.mxu0 0.0
        %360 = vmatpush1.msra.mxu0 0.0
        %361 = vmatprep.subr.mxu0 0.0
        %362 = vmatpush1.msra.mxu0 0.0
        %363 = vmatprep.subr.mxu0 0.0
        %364 = vmatpush1.msra.mxu0 0.0
        %365 = vmatprep.subr.mxu0 0.0
        %366 = vmatpush1.msra.mxu0 0.0
        %367 = vmatprep.subr.mxu0 0.0
        %368 = vmatpush1.msra.mxu0 0.0
        %369 = vmatprep.subr.mxu0 0.0
        %370 = vmatpush1.msra.mxu0 0.0
        %371 = vmatprep.subr.mxu0 0.0
        %372 = vmatpush1.msra.mxu0 0.0
        %373 = vmatprep.subr.mxu0 0.0
        %374 = vmatpush1.msra.mxu0 0.0
        %375 = vmatprep.subr.mxu0 0.0
        %376 = vmatpush1.msra.mxu0 0.0
        %377 = vmatprep.subr.mxu0 0.0
        %378 = vmatpush1.msra.mxu0 0.0
        %379 = vmatprep.subr.mxu0 0.0
        %380 = vmatpush1.msra.mxu0 0.0
        %381 = vmatprep.mubr.f32.mxu0 0.0
        %v382 = vand.u32 %v206, 4294901760
        %383 = vmatmul.mubr.f32.gmra.mrb[0].mxu0 %v382
        %v384 = vpop.f32.mrb[0].mxu0
        %v385 = vadd.f32 %v289, %v384
        %v386 = vpop.f32.mrb[0].mxu0
        %387 = vdwg.mxu0
        %388 = vmatprep.subr.mxu0 0.0
        %v389 = vand.u32 %v199, 4294901760
        %v390 = vsub.f32 %v199, %v389
        %391 = vmatpush1.msra.mxu0 %v390
        %392 = vmatprep.subr.mxu0 0.0
        %v393 = vand.u32 %v200, 4294901760
        %v394 = vsub.f32 %v200, %v393
        %395 = vmatpush1.msra.mxu0 %v394
        %396 = vmatprep.subr.mxu0 0.0
        %v397 = vand.u32 %v201, 4294901760
        %v398 = vsub.f32 %v201, %v397
        %399 = vmatpush1.msra.mxu0 %v398
        %400 = vmatprep.subr.mxu0 0.0
        %v401 = vand.u32 %v202, 4294901760
        %v402 = vsub.f32 %v202, %v401
        %403 = vmatpush1.msra.mxu0 %v402
        %404 = vmatprep.subr.mxu0 0.0
        %v405 = vand.u32 %v210, 4294901760
        %v406 = vsub.f32 %v210, %v405
        %407 = vmatpush1.msra.mxu0 %v406
        %408 = vmatprep.subr.mxu0 0.0
        %409 = vmatpush1.msra.mxu0 0.0
        %410 = vmatprep.subr.mxu0 0.0
        %411 = vmatpush1.msra.mxu0 0.0
        %412 = vmatprep.subr.mxu0 0.0
        %413 = vmatpush1.msra.mxu0 0.0
        %414 = vmatprep.subr.mxu0 0.0
        %415 = vmatpush1.msra.mxu0 0.0
        %416 = vmatprep.subr.mxu0 0.0
        %417 = vmatpush1.msra.mxu0 0.0
        %418 = vmatprep.subr.mxu0 0.0
        %419 = vmatpush1.msra.mxu0 0.0
        %420 = vmatprep.subr.mxu0 0.0
        %421 = vmatpush1.msra.mxu0 0.0
        %422 = vmatprep.subr.mxu0 0.0
        %423 = vmatpush1.msra.mxu0 0.0
        %424 = vmatprep.subr.mxu0 0.0
        %425 = vmatpush1.msra.mxu0 0.0
        %426 = vmatprep.subr.mxu0 0.0
        %427 = vmatpush1.msra.mxu0 0.0
        %428 = vmatprep.subr.mxu0 0.0
        %429 = vmatpush1.msra.mxu0 0.0
        %430 = vmatprep.subr.mxu0 0.0
        %431 = vmatpush1.msra.mxu0 0.0
        %432 = vmatprep.subr.mxu0 0.0
        %433 = vmatpush1.msra.mxu0 0.0
        %434 = vmatprep.subr.mxu0 0.0
        %435 = vmatpush1.msra.mxu0 0.0
        %436 = vmatprep.subr.mxu0 0.0
        %437 = vmatpush1.msra.mxu0 0.0
        %438 = vmatprep.subr.mxu0 0.0
        %439 = vmatpush1.msra.mxu0 0.0
        %440 = vmatprep.subr.mxu0 0.0
        %441 = vmatpush1.msra.mxu0 0.0
        %442 = vmatprep.subr.mxu0 0.0
        %443 = vmatpush1.msra.mxu0 0.0
        %444 = vmatprep.subr.mxu0 0.0
        %445 = vmatpush1.msra.mxu0 0.0
        %446 = vmatprep.subr.mxu0 0.0
        %447 = vmatpush1.msra.mxu0 0.0
        %448 = vmatprep.subr.mxu0 0.0
        %449 = vmatpush1.msra.mxu0 0.0
        %450 = vmatprep.subr.mxu0 0.0
        %451 = vmatpush1.msra.mxu0 0.0
        %452 = vmatprep.subr.mxu0 0.0
        %453 = vmatpush1.msra.mxu0 0.0
        %454 = vmatprep.subr.mxu0 0.0
        %455 = vmatpush1.msra.mxu0 0.0
        %456 = vmatprep.subr.mxu0 0.0
        %457 = vmatpush1.msra.mxu0 0.0
        %458 = vmatprep.subr.mxu0 0.0
        %459 = vmatpush1.msra.mxu0 0.0
        %460 = vmatprep.subr.mxu0 0.0
        %461 = vmatpush1.msra.mxu0 0.0
        %462 = vmatprep.mubr.f32.mxu0 0.0
        %v463 = vand.u32 %v206, 4294901760
        %v464 = vsub.f32 %v206, %v463
        %465 = vmatmul.mubr.f32.gmra.mrb[0].mxu0 %v464
        %v466 = vpop.f32.mrb[0].mxu0
        %v467 = vadd.f32 %v385, %v466
        %v468 = vpop.f32.mrb[0].mxu0
        %469 = vdwg.mxu0
        %470 = vmatprep.subr.mxu0 0.0
        %v471 = vand.u32 %v199, 4294901760
        %472 = vmatpush1.msra.mxu0 %v471
        %473 = vmatprep.subr.mxu0 0.0
        %v474 = vand.u32 %v200, 4294901760
        %475 = vmatpush1.msra.mxu0 %v474
        %476 = vmatprep.subr.mxu0 0.0
        %v477 = vand.u32 %v201, 4294901760
        %478 = vmatpush1.msra.mxu0 %v477
        %479 = vmatprep.subr.mxu0 0.0
        %v480 = vand.u32 %v202, 4294901760
        %481 = vmatpush1.msra.mxu0 %v480
        %482 = vmatprep.subr.mxu0 0.0
        %v483 = vand.u32 %v210, 4294901760
        %484 = vmatpush1.msra.mxu0 %v483
        %485 = vmatprep.subr.mxu0 0.0
        %486 = vmatpush1.msra.mxu0 0.0
        %487 = vmatprep.subr.mxu0 0.0
        %488 = vmatpush1.msra.mxu0 0.0
        %489 = vmatprep.subr.mxu0 0.0
        %490 = vmatpush1.msra.mxu0 0.0
        %491 = vmatprep.subr.mxu0 0.0
        %492 = vmatpush1.msra.mxu0 0.0
        %493 = vmatprep.subr.mxu0 0.0
        %494 = vmatpush1.msra.mxu0 0.0
        %495 = vmatprep.subr.mxu0 0.0
        %496 = vmatpush1.msra.mxu0 0.0
        %497 = vmatprep.subr.mxu0 0.0
        %498 = vmatpush1.msra.mxu0 0.0
        %499 = vmatprep.subr.mxu0 0.0
        %500 = vmatpush1.msra.mxu0 0.0
        %501 = vmatprep.subr.mxu0 0.0
        %502 = vmatpush1.msra.mxu0 0.0
        %503 = vmatprep.subr.mxu0 0.0
        %504 = vmatpush1.msra.mxu0 0.0
        %505 = vmatprep.subr.mxu0 0.0
        %506 = vmatpush1.msra.mxu0 0.0
        %507 = vmatprep.subr.mxu0 0.0
        %508 = vmatpush1.msra.mxu0 0.0
        %509 = vmatprep.subr.mxu0 0.0
        %510 = vmatpush1.msra.mxu0 0.0
        %511 = vmatprep.subr.mxu0 0.0
        %512 = vmatpush1.msra.mxu0 0.0
        %513 = vmatprep.subr.mxu0 0.0
        %514 = vmatpush1.msra.mxu0 0.0
        %515 = vmatprep.subr.mxu0 0.0
        %516 = vmatpush1.msra.mxu0 0.0
        %517 = vmatprep.subr.mxu0 0.0
        %518 = vmatpush1.msra.mxu0 0.0
        %519 = vmatprep.subr.mxu0 0.0
        %520 = vmatpush1.msra.mxu0 0.0
        %521 = vmatprep.subr.mxu0 0.0
        %522 = vmatpush1.msra.mxu0 0.0
        %523 = vmatprep.subr.mxu0 0.0
        %524 = vmatpush1.msra.mxu0 0.0
        %525 = vmatprep.subr.mxu0 0.0
        %526 = vmatpush1.msra.mxu0 0.0
        %527 = vmatprep.subr.mxu0 0.0
        %528 = vmatpush1.msra.mxu0 0.0
        %529 = vmatprep.subr.mxu0 0.0
        %530 = vmatpush1.msra.mxu0 0.0
        %531 = vmatprep.subr.mxu0 0.0
        %532 = vmatpush1.msra.mxu0 0.0
        %533 = vmatprep.subr.mxu0 0.0
        %534 = vmatpush1.msra.mxu0 0.0
        %535 = vmatprep.subr.mxu0 0.0
        %536 = vmatpush1.msra.mxu0 0.0
        %537 = vmatprep.subr.mxu0 0.0
        %538 = vmatpush1.msra.mxu0 0.0
        %539 = vmatprep.mubr.f32.mxu0 0.0
        %v540 = vand.u32 %v206, 4294901760
        %v541 = vsub.f32 %v206, %v540
        %v542 = vand.u32 %v541, 4294901760
        %543 = vmatmul.mubr.f32.gmra.mrb[0].mxu0 %v542
        %v544 = vpop.f32.mrb[0].mxu0
        %v545 = vadd.f32 %v467, %v544
        %v546 = vpop.f32.mrb[0].mxu0
        %547 = vdwg.mxu0
        %548 = vmatprep.subr.mxu0 0.0
        %v549 = vand.u32 %v199, 4294901760
        %v550 = vsub.f32 %v199, %v549
        %v551 = vand.u32 %v550, 4294901760
        %552 = vmatpush1.msra.mxu0 %v551
        %553 = vmatprep.subr.mxu0 0.0
        %v554 = vand.u32 %v200, 4294901760
        %v555 = vsub.f32 %v200, %v554
        %v556 = vand.u32 %v555, 4294901760
        %557 = vmatpush1.msra.mxu0 %v556
        %558 = vmatprep.subr.mxu0 0.0
        %v559 = vand.u32 %v201, 4294901760
        %v560 = vsub.f32 %v201, %v559
        %v561 = vand.u32 %v560, 4294901760
        %562 = vmatpush1.msra.mxu0 %v561
        %563 = vmatprep.subr.mxu0 0.0
        %v564 = vand.u32 %v202, 4294901760
        %v565 = vsub.f32 %v202, %v564
        %v566 = vand.u32 %v565, 4294901760
        %567 = vmatpush1.msra.mxu0 %v566
        %568 = vmatprep.subr.mxu0 0.0
        %v569 = vand.u32 %v210, 4294901760
        %v570 = vsub.f32 %v210, %v569
        %v571 = vand.u32 %v570, 4294901760
        %572 = vmatpush1.msra.mxu0 %v571
        %573 = vmatprep.subr.mxu0 0.0
        %574 = vmatpush1.msra.mxu0 0.0
        %575 = vmatprep.subr.mxu0 0.0
        %576 = vmatpush1.msra.mxu0 0.0
        %577 = vmatprep.subr.mxu0 0.0
        %578 = vmatpush1.msra.mxu0 0.0
        %579 = vmatprep.subr.mxu0 0.0
        %580 = vmatpush1.msra.mxu0 0.0
        %581 = vmatprep.subr.mxu0 0.0
        %582 = vmatpush1.msra.mxu0 0.0
        %583 = vmatprep.subr.mxu0 0.0
        %584 = vmatpush1.msra.mxu0 0.0
        %585 = vmatprep.subr.mxu0 0.0
        %586 = vmatpush1.msra.mxu0 0.0
        %587 = vmatprep.subr.mxu0 0.0
        %588 = vmatpush1.msra.mxu0 0.0
        %589 = vmatprep.subr.mxu0 0.0
        %590 = vmatpush1.msra.mxu0 0.0
        %591 = vmatprep.subr.mxu0 0.0
        %592 = vmatpush1.msra.mxu0 0.0
        %593 = vmatprep.subr.mxu0 0.0
        %594 = vmatpush1.msra.mxu0 0.0
        %595 = vmatprep.subr.mxu0 0.0
        %596 = vmatpush1.msra.mxu0 0.0
        %597 = vmatprep.subr.mxu0 0.0
        %598 = vmatpush1.msra.mxu0 0.0
        %599 = vmatprep.subr.mxu0 0.0
        %600 = vmatpush1.msra.mxu0 0.0
        %601 = vmatprep.subr.mxu0 0.0
        %602 = vmatpush1.msra.mxu0 0.0
        %603 = vmatprep.subr.mxu0 0.0
        %604 = vmatpush1.msra.mxu0 0.0
        %605 = vmatprep.subr.mxu0 0.0
        %606 = vmatpush1.msra.mxu0 0.0
        %607 = vmatprep.subr.mxu0 0.0
        %608 = vmatpush1.msra.mxu0 0.0
        %609 = vmatprep.subr.mxu0 0.0
        %610 = vmatpush1.msra.mxu0 0.0
        %611 = vmatprep.subr.mxu0 0.0
        %612 = vmatpush1.msra.mxu0 0.0
        %613 = vmatprep.subr.mxu0 0.0
        %614 = vmatpush1.msra.mxu0 0.0
        %615 = vmatprep.subr.mxu0 0.0
        %616 = vmatpush1.msra.mxu0 0.0
        %617 = vmatprep.subr.mxu0 0.0
        %618 = vmatpush1.msra.mxu0 0.0
        %619 = vmatprep.subr.mxu0 0.0
        %620 = vmatpush1.msra.mxu0 0.0
        %621 = vmatprep.subr.mxu0 0.0
        %622 = vmatpush1.msra.mxu0 0.0
        %623 = vmatprep.subr.mxu0 0.0
        %624 = vmatpush1.msra.mxu0 0.0
        %625 = vmatprep.subr.mxu0 0.0
        %626 = vmatpush1.msra.mxu0 0.0
        %627 = vmatprep.mubr.f32.mxu0 0.0
        %v628 = vand.u32 %v206, 4294901760
        %629 = vmatmul.mubr.f32.gmra.mrb[0].mxu0 %v628
        %v630 = vpop.f32.mrb[0].mxu0
        %v631 = vadd.f32 %v545, %v630
        %v632 = vpop.f32.mrb[0].mxu0
        %633 = vdwg.mxu0
        %634 = vmatprep.subr.mxu0 0.0
        %v635 = vand.u32 %v199, 4294901760
        %636 = vmatpush1.msra.mxu0 %v635
        %637 = vmatprep.subr.mxu0 0.0
        %v638 = vand.u32 %v200, 4294901760
        %639 = vmatpush1.msra.mxu0 %v638
        %640 = vmatprep.subr.mxu0 0.0
        %v641 = vand.u32 %v201, 4294901760
        %642 = vmatpush1.msra.mxu0 %v641
        %643 = vmatprep.subr.mxu0 0.0
        %v644 = vand.u32 %v202, 4294901760
        %645 = vmatpush1.msra.mxu0 %v644
        %646 = vmatprep.subr.mxu0 0.0
        %v647 = vand.u32 %v210, 4294901760
        %648 = vmatpush1.msra.mxu0 %v647
        %649 = vmatprep.subr.mxu0 0.0
        %650 = vmatpush1.msra.mxu0 0.0
        %651 = vmatprep.subr.mxu0 0.0
        %652 = vmatpush1.msra.mxu0 0.0
        %653 = vmatprep.subr.mxu0 0.0
        %654 = vmatpush1.msra.mxu0 0.0
        %655 = vmatprep.subr.mxu0 0.0
        %656 = vmatpush1.msra.mxu0 0.0
        %657 = vmatprep.subr.mxu0 0.0
        %658 = vmatpush1.msra.mxu0 0.0
        %659 = vmatprep.subr.mxu0 0.0
        %660 = vmatpush1.msra.mxu0 0.0
        %661 = vmatprep.subr.mxu0 0.0
        %662 = vmatpush1.msra.mxu0 0.0
        %663 = vmatprep.subr.mxu0 0.0
        %664 = vmatpush1.msra.mxu0 0.0
        %665 = vmatprep.subr.mxu0 0.0
        %666 = vmatpush1.msra.mxu0 0.0
        %667 = vmatprep.subr.mxu0 0.0
        %668 = vmatpush1.msra.mxu0 0.0
        %669 = vmatprep.subr.mxu0 0.0
        %670 = vmatpush1.msra.mxu0 0.0
        %671 = vmatprep.subr.mxu0 0.0
        %672 = vmatpush1.msra.mxu0 0.0
        %673 = vmatprep.subr.mxu0 0.0
        %674 = vmatpush1.msra.mxu0 0.0
        %675 = vmatprep.subr.mxu0 0.0
        %676 = vmatpush1.msra.mxu0 0.0
        %677 = vmatprep.subr.mxu0 0.0
        %678 = vmatpush1.msra.mxu0 0.0
        %679 = vmatprep.subr.mxu0 0.0
        %680 = vmatpush1.msra.mxu0 0.0
        %681 = vmatprep.subr.mxu0 0.0
        %682 = vmatpush1.msra.mxu0 0.0
        %683 = vmatprep.subr.mxu0 0.0
        %684 = vmatpush1.msra.mxu0 0.0
        %685 = vmatprep.subr.mxu0 0.0
        %686 = vmatpush1.msra.mxu0 0.0
        %687 = vmatprep.subr.mxu0 0.0
        %688 = vmatpush1.msra.mxu0 0.0
        %689 = vmatprep.subr.mxu0 0.0
        %690 = vmatpush1.msra.mxu0 0.0
        %691 = vmatprep.subr.mxu0 0.0
        %692 = vmatpush1.msra.mxu0 0.0
        %693 = vmatprep.subr.mxu0 0.0
        %694 = vmatpush1.msra.mxu0 0.0
        %695 = vmatprep.subr.mxu0 0.0
        %696 = vmatpush1.msra.mxu0 0.0
        %697 = vmatprep.subr.mxu0 0.0
        %698 = vmatpush1.msra.mxu0 0.0
        %699 = vmatprep.subr.mxu0 0.0
        %700 = vmatpush1.msra.mxu0 0.0
        %701 = vmatprep.subr.mxu0 0.0
        %702 = vmatpush1.msra.mxu0 0.0
        %703 = vmatprep.mubr.f32.mxu0 0.0
        %v704 = vand.u32 %v206, 4294901760
        %705 = vmatmul.mubr.f32.gmra.mrb[0].mxu0 %v704
        %v706 = vpop.f32.mrb[0].mxu0
        %v707 = vadd.f32 %v631, %v706
        %v708 = vpop.f32.mrb[0].mxu0
        %709 = vdwg.mxu0
        %v710 = vrcp.pop %v707
        %712 = vrot.lane.b32.xlu0 %v710, 1
        %v713 = vpop.permute.xlu0 %712
        %v715 = vmul.f32 %v707, %v713
        %716 = vrot.lane.b32.xlu0 %v710, 2
        %v717 = vpop.permute.xlu0 %716
        %v719 = vmul.f32 %v707, %v717
        %v720 = vmul.f32 %v715, %v715
        %722 = vrot.lane.b32.xlu0 %v720, 1
        %v723 = vpop.permute.xlu0 %722
        %v725 = vsub.f32 %v719, %v723
        %v726 = vmax.f32 %v725, 0.0
        %v727 = vrsqrt.pop %v726
        %v728 = vmul.f32 %v726, %v727
        %vm729 = vcmp.eq.f32.partialorder %v726, inf
        %v730 = vsel %vm729, %v726, %v728
        %vm731 = vcmp.eq.f32.partialorder %v726, 0.0
        %v732 = vand.u32 %v726, 2147483648
        %v733 = vsel %vm731, %v732, %v730
        %735 = vrot.lane.b32.xlu0 %v733, 126
        %v736 = vpop.permute.xlu0 %735
        %vm738 = vcmask 7168
        %739 = vst.msk [vmem:[%s196] sm:$0xff] %vm738, %v736
        %p740 = scmp.lt.s32.totalorder %s21, 1
        %s741 = scalar_select %p740, %s21, 1
        %p742 = scmp.lt.s32.totalorder %s22, 0
        %s743 = scalar_select %p742, %s22, 0
        %s744 = sadd.s32 %s743, %s741
        %s745 = smul.addr %s744, 8
        %s746 = scalar_lea.vmem %s2, %s745
        // Predicated region
        $region37: #{tpu_custom_call.1} parent=27 // pred_check
          %p747 = pneg %p98
        $region38: #{tpu_custom_call.1} parent=27 // pred_check_branch
          %749 = sbr.rel (%p747) target = $region40
        $region39: #{tpu_custom_call.1} parent=27 // pred_region
          _
        $region40: #{tpu_custom_call.1} parent=27 // pred_fallthru
          _
      $region28: #{tpu_custom_call.1} parent=5 // pred_fallthru
        _
      %p750 = scmp.le.s32.totalorder 2, %s12
      // Predicated region
      $region41: #{tpu_custom_call.1} parent=5 // pred_check
        %p751 = pneg %p750
      $region42: #{tpu_custom_call.1} parent=5 // pred_check_branch
        %753 = sbr.rel (%p751) target = $region44
      $region43: #{tpu_custom_call.1} parent=5 // pred_region
        %s754 = ssub.s32 %s12, 2
        // Predicated region
        $region45: #{tpu_custom_call.1} parent=43 // pred_check
          %p755 = pneg %p104
        $region46: #{tpu_custom_call.1} parent=43 // pred_check_branch
          %757 = sbr.rel (%p755) target = $region48
        $region47: #{tpu_custom_call.1} parent=43 // pred_region
          %p758 = scmp.lt.s32.totalorder %s23, 1
          %s759 = scalar_select %p758, %s23, 1
          %p760 = scmp.lt.s32.totalorder %s24, 0
          %s761 = scalar_select %p760, %s24, 0
          %s762 = sadd.s32 %s761, %s759
          %s763 = smul.addr %s762, 8
          %s764 = scalar_lea.vmem %s2, %s763
        $region48: #{tpu_custom_call.1} parent=43 // pred_fallthru
          _
      $region44: #{tpu_custom_call.1} parent=5 // pred_fallthru
        _
    $region6: #{tpu_custom_call.1} parent=1 // loop_footer
      %s16 = sadd.s32 1, %s12
    $region7: #{tpu_custom_call.1} parent=1 // loop_footer_branch
      %11 = sbr.rel target = $region3
    $region8: #{tpu_custom_call.1} parent=1 // loop_exit
      _
    %765 = vsyncpa [#allocation3], 1
    %s766 = scalar_lea.sflag [#allocation3], 1
    %767 = vsyncpa %s766, 1
    %768 = vsyncpa [#allocation5], 1

</llo_original>
